<compile_context>
chip_gen: v6e
topology: v6e:2x2x1
jax: 0.10.0
libtpu: 0.0.40
codegen_flags: <defaults>
</compile_context>

<pallas_src>
import functools

import numpy as np
import jax
import jax.numpy as jnp
from jax import lax
from jax.experimental import pallas as pl
from jax.experimental.pallas import tpu as pltpu


# --------------------------------------------------------------------------- #
# pltpu.roll direction probe (robust to either rotate convention)
# --------------------------------------------------------------------------- #
_ROLL_NUMPY = None


def _roll_matches_numpy():
    """True iff pltpu.roll(x, s, axis) == jnp.roll(x, s, axis)."""
    global _ROLL_NUMPY
    if _ROLL_NUMPY is None:
        def k(x_ref, o_ref):
            o_ref[...] = pltpu.roll(x_ref[...], shift=1, axis=1)

        x = jnp.tile(jnp.arange(128, dtype=jnp.float32)[None, :], (8, 1))
        y = pl.pallas_call(
            k, out_shape=jax.ShapeDtypeStruct((8, 128), jnp.float32))(x)
        _ROLL_NUMPY = bool(jnp.array_equal(y, jnp.roll(x, 1, axis=1)))
    return _ROLL_NUMPY


# --------------------------------------------------------------------------- #
# Fused Up-block kernel
# --------------------------------------------------------------------------- #
def _up_block_kernel(*refs, nb, Hs, Ws, H, W, pad_t, pad_l, has_out,
                     compute_dtype, roll_numpy):
    """One Up block (+ optional OutConv tail) for `nb` images.

    ap_ref : (1, Cprev, nb*Hs*Ws)  previous activation, channels-first flat
    sk_ref : (1, Cskip, nb*H*W)    encoder skip, channels-first flat
    wup    : (4, Cup, Cprev)       ConvTranspose2d weight per 2x2 quadrant
    bup    : (Cup, 1)              ConvTranspose2d bias
    sq     : (4, nb*Hs*Ws, nb*H*W) 0/1 pixel-shuffle + F.pad scatter matrices
    w1/w2  : (Cm, 9*Ccat) / (Co, 9*Cm)   3x3 conv weights, tap-major K
    s*/t*  : (C, 1)                folded BatchNorm scale / shift
    wo/bo  : (Cf, Co) / (Cf, 1)    1x1 OutConv (last block only)
    o_ref  : (1, Cout_or_Cf, nb*H*W)  lane-dense channels-first output
    """
    if has_out:
        (ap_ref, sk_ref, wup_ref, bup_ref, sq_ref,
         w1_ref, s1_ref, t1_ref, w2_ref, s2_ref, t2_ref,
         wo_ref, bo_ref, o_ref) = refs
    else:
        (ap_ref, sk_ref, wup_ref, bup_ref, sq_ref,
         w1_ref, s1_ref, t1_ref, w2_ref, s2_ref, t2_ref, o_ref) = refs

    HW = H * W
    L = nb * HW
    cd = compute_dtype

    def mm(a, b):  # MXU matmul, f32 accumulation
        return jnp.dot(a.astype(cd), b.astype(cd),
                       preferred_element_type=jnp.float32)

    # per-lane (image-local) row / column indices, shared by all masks below
    lane = lax.broadcasted_iota(jnp.int32, (1, L), 1)
    p = lane % HW
    row = p // W
    col = p % W

    # ---- ConvTranspose2d(k=2,s=2) + 2x2 pixel shuffle + F.pad (fused) -------- #
    in_up = ((row >= pad_t) & (row < pad_t + 2 * Hs) &
             (col >= pad_l) & (col < pad_l + 2 * Ws))
    ap = ap_ref[0]                                       # (Cprev, nb*Hs*Ws)
    up = bup_ref[...] * in_up.astype(jnp.float32)        # bias only on up region
    for q in range(4):                                   # quadrant q = dy*2 + dx
        uq = mm(wup_ref[q], ap)                          # channel mix (Cup, nb*Hs*Ws)
        up = up + mm(uq, sq_ref[q])                      # scatter -> (Cup, nb*H*W)

    # ---- channel concat [skip, up]  (sublane concat, no HBM traffic) --------- #
    xcat = jnp.concatenate([sk_ref[0], up], axis=0)      # (Ccat, L)

    # ---- 3x3 conv: roll + edge-mask im2col, ONE K-stacked lane-dense matmul -- #
    def conv3x3(x, w_ref):
        x = x.astype(cd)
        taps = []
        for dy in (-1, 0, 1):
            rmask = (row + dy >= 0) & (row + dy < H)
            for dx in (-1, 0, 1):
                m = (rmask & (col + dx >= 0) & (col + dx < W)).astype(x.dtype)
                d = dy * W + dx
                if d == 0:
                    shifted = x
                else:
                    s = (-d) % L if roll_numpy else d % L
                    shifted = pltpu.roll(x, shift=s, axis=1)
                taps.append(shifted * m)
        return mm(w_ref[...], jnp.concatenate(taps, axis=0))   # (Cout, L) f32

    h1 = jnp.maximum(conv3x3(xcat, w1_ref) * s1_ref[...] + t1_ref[...], 0.0)
    h2 = jnp.maximum(conv3x3(h1, w2_ref) * s2_ref[...] + t2_ref[...], 0.0)

    if has_out:                                          # fused 1x1 OutConv tail
        o_ref[0] = (mm(wo_ref[...], h2) + bo_ref[...]).astype(o_ref.dtype)
    else:
        o_ref[0] = h2.astype(o_ref.dtype)


# --------------------------------------------------------------------------- #
# pallas_call wrapper
# --------------------------------------------------------------------------- #
def _full_spec(arr):
    zeros = (0,) * arr.ndim
    return pl.BlockSpec(arr.shape, lambda g: zeros)


def _run_block(ap, sk, blk, *, compute_dtype, roll_numpy):
    meta = blk["meta"]
    G = ap.shape[0]
    nb, Hs, Ws, H, W = meta["nb"], meta["Hs"], meta["Ws"], meta["H"], meta["W"]
    L = nb * H * W
    out_c = meta["out_c"]
    has_out = meta["has_out"]

    ins = [ap, sk, blk["wup"], blk["bup"], blk["sq"],
           blk["w1"], blk["s1"], blk["t1"], blk["w2"], blk["s2"], blk["t2"]]
    if has_out:
        ins += [blk["wo"], blk["bo"]]

    in_specs = ([pl.BlockSpec((1,) + ap.shape[1:], lambda g: (g, 0, 0)),
                 pl.BlockSpec((1,) + sk.shape[1:], lambda g: (g, 0, 0))]
                + [_full_spec(a) for a in ins[2:]])

    kernel = functools.partial(
        _up_block_kernel, nb=nb, Hs=Hs, Ws=Ws, H=H, W=W,
        pad_t=meta["pad_t"], pad_l=meta["pad_l"], has_out=has_out,
        compute_dtype=compute_dtype, roll_numpy=roll_numpy)

    return pl.pallas_call(
        kernel,
        out_shape=jax.ShapeDtypeStruct((G, out_c, L), ap.dtype),
        grid=(G,),
        in_specs=in_specs,
        out_specs=pl.BlockSpec((1, out_c, L), lambda g: (g, 0, 0)),
        compiler_params=pltpu.CompilerParams(
            dimension_semantics=("parallel",)),
    )(*ins)


# --------------------------------------------------------------------------- #
# One-time parameter preparation (hoisted out of the per-forward path)
# --------------------------------------------------------------------------- #
def _fold_bn(gamma, beta, mean, var, eps=1e-5):
    inv = gamma / jnp.sqrt(var + eps)
    return inv, beta - mean * inv


def _scatter_mats(nb, Hs, Ws, H, W, pad_t, pad_l, dtype):
    """0/1 matrices S[q]: up_padded = sum_q (Wq @ a_prev) @ S[q]
    implements the 2x2 pixel shuffle + F.pad as lane-dense matmuls."""
    Ls, L = nb * Hs * Ws, nb * H * W
    S = np.zeros((4, Ls, L), np.float32)
    for q in range(4):
        dy, dx = q // 2, q % 2
        for b in range(nb):
            for i in range(Hs):
                for j in range(Ws):
                    src = b * Hs * Ws + i * Ws + j
                    dst = b * H * W + (pad_t + 2 * i + dy) * W + (pad_l + 2 * j + dx)
                    S[q, src, dst] = 1.0
    return jnp.asarray(S, dtype)


def _auto_images_per_call(batch):
    # Single-TC v5e/v6e: whole batch in one invocation (no grid-step overhead).
    # 2-TC v7x: keep a parallel batch grid axis so both TensorCores work.
    try:
        kind = jax.devices()[0].device_kind.lower()
    except Exception:
        kind = ""
    multi_tc = ("v7" in kind) or ("7x" in kind)
    return 1 if (multi_tc and batch > 1) else batch


def prepare_decoder_params(params, x_shape, skip_shapes, *,
                           images_per_call=None, use_bf16=False):
    B, _, cur_h, cur_w = (int(s) for s in x_shape)
    ipc = _auto_images_per_call(B) if images_per_call is None else images_per_call
    assert ipc in (1, B), "images_per_call must be 1 or the full batch"
    nb = ipc
    wd = jnp.bfloat16 if use_bf16 else jnp.float32

    blocks = params["blocks"]
    n = len(blocks)
    out_blocks = []
    for i, blk in enumerate(blocks):
        sshape = skip_shapes[-(i + 1)]
        Hs, Ws = cur_h, cur_w
        H, W = int(sshape[2]), int(sshape[3])
        assert H >= 2 * Hs and W >= 2 * Ws
        pad_t, pad_l = (H - 2 * Hs) // 2, (W - 2 * Ws) // 2

        cup = blk["up_w"].shape[1]
        cm = blk["c1_w"].shape[0]
        co = blk["c2_w"].shape[0]
        s1, t1 = _fold_bn(blk["bn1_g"], blk["bn1_b"], blk["bn1_m"], blk["bn1_v"])
        s2, t2 = _fold_bn(blk["bn2_g"], blk["bn2_b"], blk["bn2_m"], blk["bn2_v"])

        entry = dict(
            # ConvTranspose2d (Cin,Cout,2,2) -> (quadrant, Cout, Cin), q = dy*2+dx
            wup=jnp.transpose(blk["up_w"], (2, 3, 1, 0)).reshape(4, cup, -1).astype(wd),
            bup=blk["up_b"].reshape(cup, 1).astype(jnp.float32),
            sq=_scatter_mats(nb, Hs, Ws, H, W, pad_t, pad_l, wd),
            # Conv2d (Cout,Cin,3,3) -> (Cout, 9*Cin), rows ordered (ky, kx, cin)
            w1=jnp.transpose(blk["c1_w"], (0, 2, 3, 1)).reshape(cm, -1).astype(wd),
            s1=s1.reshape(cm, 1).astype(jnp.float32),
            t1=t1.reshape(cm, 1).astype(jnp.float32),
            w2=jnp.transpose(blk["c2_w"], (0, 2, 3, 1)).reshape(co, -1).astype(wd),
            s2=s2.reshape(co, 1).astype(jnp.float32),
            t2=t2.reshape(co, 1).astype(jnp.float32),
            meta=dict(nb=nb, Hs=Hs, Ws=Ws, H=H, W=W, pad_t=pad_t, pad_l=pad_l,
                      out_c=co, has_out=False),
        )
        if i == n - 1:
            cf = params["out_w"].shape[0]
            entry["wo"] = params["out_w"].reshape(cf, -1).astype(wd)
            entry["bo"] = params["out_b"].reshape(cf, 1).astype(jnp.float32)
            entry["meta"]["out_c"] = cf
            entry["meta"]["has_out"] = True
        out_blocks.append(entry)
        cur_h, cur_w = H, W

    return dict(blocks=out_blocks, ipc=ipc, compute_dtype=wd,
                roll_numpy=_roll_matches_numpy())


# --------------------------------------------------------------------------- #
# Decoder forward (mirrors Decoder.forward with bilinear=False)
# --------------------------------------------------------------------------- #
def decoder_forward(prepared, x_nchw, intermediate_output_nchw):
    ipc = prepared["ipc"]
    blocks = prepared["blocks"]
    cd = prepared["compute_dtype"]
    roll_numpy = prepared["roll_numpy"]
    B = x_nchw.shape[0]

    def to_cf(t):  # NCHW -> (grid, C, nb*H*W) channels-first flat
        b, c, h, w = t.shape
        if ipc == 1:
            return t.reshape(b, c, h * w)
        return jnp.transpose(t, (1, 0, 2, 3)).reshape(1, c, b * h * w)

    a = to_cf(x_nchw)
    for i, blk in enumerate(blocks):
        sk = to_cf(intermediate_output_nchw[-(i + 1)])
        a = _run_block(a, sk, blk, compute_dtype=cd, roll_numpy=roll_numpy)

    last = blocks[-1]["meta"]
    Cf, H, W = last["out_c"], last["H"], last["W"]
    if ipc == 1:
        return a.reshape(B, Cf, H, W)
    return jnp.transpose(a.reshape(Cf, B, H, W), (1, 0, 2, 3))      # NCHW


# --------------------------------------------------------------------------- #
# Pure-JAX reference (NCHW, eval-mode BN) for correctness checking
# --------------------------------------------------------------------------- #
def _ref_decoder_forward(params, x, skips):
    hp = lax.Precision.HIGHEST

    def conv3x3(x, w):
        return lax.conv_general_dilated(
            x, w, window_strides=(1, 1), padding=((1, 1), (1, 1)),
            dimension_numbers=("NCHW", "OIHW", "NCHW"), precision=hp)

    def bn(x, g, b, m, v, eps=1e-5):
        inv = g / jnp.sqrt(v + eps)
        return x * inv[None, :, None, None] + (b - m * inv)[None, :, None, None]

    def up_tconv(x, w, b):  # ConvTranspose2d(k=2, s=2)
        t = jnp.einsum("bcij,copq->boipjq", x, w, precision=hp)
        Bb, Co, Hs, _, Ws, _ = t.shape
        return t.reshape(Bb, Co, 2 * Hs, 2 * Ws) + b[None, :, None, None]

    for i, blk in enumerate(params["blocks"]):
        x2 = skips[-(i + 1)]
        x1 = up_tconv(x, blk["up_w"], blk["up_b"])
        dY = x2.shape[2] - x1.shape[2]
        dX = x2.shape[3] - x1.shape[3]
        x1 = jnp.pad(x1, ((0, 0), (0, 0),
                          (dY // 2, dY - dY // 2), (dX // 2, dX - dX // 2)))
        xc = jnp.concatenate([x2, x1], axis=1)
        h = jax.nn.relu(bn(conv3x3(xc, blk["c1_w"]),
                           blk["bn1_g"], blk["bn1_b"], blk["bn1_m"], blk["bn1_v"]))
        x = jax.nn.relu(bn(conv3x3(h, blk["c2_w"]),
                           blk["bn2_g"], blk["bn2_b"], blk["bn2_m"], blk["bn2_v"]))
    wo = params["out_w"][:, :, 0, 0]
    return (jnp.einsum("bchw,oc->bohw", x, wo, precision=hp)
            + params["out_b"][None, :, None, None])


# --------------------------------------------------------------------------- #
# Deterministic parameter construction (shapes match Decoder.__init__, bilinear=False)
# --------------------------------------------------------------------------- #
def init_decoder_params(key, hidden_channels, out_channels):
    rev = list(reversed(hidden_channels))
    io_pairs = [(rev[i], rev[i + 1]) for i in range(len(hidden_channels) - 2)]
    io_pairs.append((hidden_channels[1], hidden_channels[0]))

    def nrm(k, shape, s=0.1):
        return (s * jax.random.normal(k, shape)).astype(jnp.float32)

    blocks = []
    for (cin, cout) in io_pairs:
        key, *ks = jax.random.split(key, 10)
        mid = cout  # DoubleConv(in, out): mid_channels = out_channels
        blocks.append(dict(
            up_w=nrm(ks[0], (cin, cin // 2, 2, 2)),      # ConvTranspose2d weight
            up_b=nrm(ks[1], (cin // 2,)),
            c1_w=nrm(ks[2], (mid, cin, 3, 3)),           # Conv2d(cin, mid, 3, bias=False)
            bn1_g=1.0 + nrm(ks[3], (mid,)),
            bn1_b=nrm(ks[4], (mid,)),
            bn1_m=jnp.zeros((mid,), jnp.float32),
            bn1_v=jnp.ones((mid,), jnp.float32),
            c2_w=nrm(ks[5], (cout, mid, 3, 3)),          # Conv2d(mid, cout, 3, bias=False)
            bn2_g=1.0 + nrm(ks[6], (cout,)),
            bn2_b=nrm(ks[7], (cout,)),
            bn2_m=jnp.zeros((cout,), jnp.float32),
            bn2_v=jnp.ones((cout,), jnp.float32),
        ))

    key, ko_w, ko_b = jax.random.split(key, 3)
    return dict(
        blocks=blocks,
        out_w=nrm(ko_w, (out_channels, hidden_channels[0], 1, 1)),
        out_b=nrm(ko_b, (out_channels,)),
    )


# --------------------------------------------------------------------------- #
if __name__ == "__main__":
    hidden_channels = [8, 16, 32]
    out_channels = 3
    B = 2

    key = jax.random.PRNGKey(0)
    kp, kx, k1, k2 = jax.random.split(key, 4)
    params = init_decoder_params(kp, hidden_channels, out_channels)

    # bottleneck feature (NCHW) and encoder skip features (NCHW)
    x = jax.random.normal(kx, (B, 32, 4, 4), jnp.float32)
    intermediate_output = [
        jax.random.normal(k1, (B, 8, 16, 16), jnp.float32),   # used by last Up
        jax.random.normal(k2, (B, 16, 8, 8), jnp.float32),    # used by first Up
    ]

    prepared = prepare_decoder_params(
        params, x.shape, [t.shape for t in intermediate_output],
        use_bf16=False)  # f32 MXU operands to preserve PyTorch numerics

    fwd = jax.jit(lambda xx, skips: decoder_forward(prepared, xx, skips))
    out = fwd(x, intermediate_output)
    out = jax.block_until_ready(out)

    assert out.shape == (B, out_channels, 16, 16), out.shape
    assert bool(jnp.all(jnp.isfinite(out)))

    ref = _ref_decoder_forward(params, x, intermediate_output)
    err = float(jnp.max(jnp.abs(out - ref)))
    assert err < 1e-1, f"max abs err vs reference: {err}"
    print("KERNEL_OK")
</pallas_src>

<mosaic_0001>
module attributes {stable_mosaic.version = 11 : i64} {
  func.func @k(%arg0: memref<8x128xf32, #tpu.memory_space<vmem>>, %arg1: memref<8x128xf32, #tpu.memory_space<vmem>>) attributes {dimension_semantics = [], scalar_prefetch = 0 : i64, scratch_operands = 0 : i64, tpu.core_type = #tpu.core_type<tc>} {
    %c0 = arith.constant 0 : index
    %c0_0 = arith.constant 0 : index
    %0 = vector.load %arg0[%c0, %c0_0] : memref<8x128xf32, #tpu.memory_space<vmem>>, vector<8x128xf32>
    %c1_i32 = arith.constant 1 : i32
    %1 = tpu.dynamic_rotate %0 by %c1_i32 dim 1 : vector<8x128xf32>, i32 -> vector<8x128xf32>
    %c0_1 = arith.constant 0 : index
    %c0_2 = arith.constant 0 : index
    %2 = vector.load %arg1[%c0_1, %c0_2] : memref<8x128xf32, #tpu.memory_space<vmem>>, vector<8x128xf32>
    tpu.vector_store %arg1[%c0_1, %c0_2], %1 {strides = array<i32>} : memref<8x128xf32, #tpu.memory_space<vmem>>, vector<8x128xf32>,
    return
  }
}

</mosaic_0001>

<llo_original>
// kernel: tpu_custom_call.1
$region0: #{tpu_custom_call.1}
  #allocation0 [shape = 'u32[]', space=smem, size = 0x4, offset = 0x4, fixed_abs, tag = 'smem constant byte address 0x4 - core index']
  #allocation1 [shape = 'u32[144,128]{1,0:T(1,128)}', space=vmem, size = 0x12000, scoped, tag = 'internal scratch']
  %s0 = inlined_call_operand.hbm [shape: f32[8,128], index: 0, kind: input, shape index: {}]
  %s1 = inlined_call_operand.hbm [shape: f32[8,128], index: 1, kind: output, shape index: {}]
  %s2 = sld [smem:[#allocation0]]
  $region18: #{tpu_custom_call.1} parent=0
    _
  %s4 = ssub.s32 1, %s2
  %s5 = scalar_select 0, %s4, %s2
  $region1: #{tpu_custom_call.1} parent=0
    #allocation2 [shape = 'u8[4096]{0}', space=vmem, size = 0x1000, scoped, tag = 'input window, operand 0, single buffered']
    #allocation3 [shape = 's32[1]{0}', space=sflag, size = 0x4, scoped, tag = 'scoped memory for tpu_custom_call.1']
    #allocation4 [shape = 's32[1]{0}', space=sflag, size = 0x4, scoped, tag = 'scoped memory for tpu_custom_call.1']
    #allocation5 [shape = 'u8[4096]{0}', space=vmem, size = 0x1000, scoped, tag = 'output window, operand 0, single buffered']
    %6 = vsyncpa [#allocation3], 0
    %7 = vsyncpa [#allocation4], 0
    // Predicated region
    $region2: #{tpu_custom_call.1} parent=1 // pred_check
      _
    $region3: #{tpu_custom_call.1} parent=1 // pred_check_branch
      %9 = sbr.rel (0) target = $region5
    $region4: #{tpu_custom_call.1} parent=1 // pred_region
      %s11 = ssub.s32 128, 128
      %12 = vsyncadd [#allocation3], %s11
      %s14 = sshll.u32 [#allocation2], 4
      %s15 = int_to_ptr.vmem [resolvable:$true] %s14
      %17 = dma.hbm_to_vmem [thread:$0]  %s0, 128, %s15, [#allocation3]
    $region5: #{tpu_custom_call.1} parent=1 // pred_fallthru
      _
    // Predicated region
    $region6: #{tpu_custom_call.1} parent=1 // pred_check
      _
    $region7: #{tpu_custom_call.1} parent=1 // pred_check_branch
      %19 = sbr.rel (0) target = $region9
    $region8: #{tpu_custom_call.1} parent=1 // pred_region
      %20 = dma.done [#allocation3], 128
    $region9: #{tpu_custom_call.1} parent=1 // pred_fallthru
      _
    %v21 = vld [vmem:[#allocation2] sm:$0xff]
    %22 = vrot.lane.b32.xlu0 %v21, 1
    %v23 = vpop.permute.xlu0 %22
    %24 = vst [vmem:[#allocation5] sm:$0xff] %v23
    // Predicated region
    $region10: #{tpu_custom_call.1} parent=1 // pred_check
      _
    $region11: #{tpu_custom_call.1} parent=1 // pred_check_branch
      %26 = sbr.rel (0) target = $region13
    $region12: #{tpu_custom_call.1} parent=1 // pred_region
      %s28 = ssub.s32 128, 128
      %29 = vsyncadd [#allocation4], %s28
      %s31 = sshll.u32 [#allocation5], 4
      %s32 = int_to_ptr.vmem [resolvable:$true] %s31
      %34 = dma.vmem_to_hbm [thread:$0]  %s32, 128, %s1, [#allocation4]
    $region13: #{tpu_custom_call.1} parent=1 // pred_fallthru
      _
    // Predicated region
    $region14: #{tpu_custom_call.1} parent=1 // pred_check
      _
    $region15: #{tpu_custom_call.1} parent=1 // pred_check_branch
      %36 = sbr.rel (0) target = $region17
    $region16: #{tpu_custom_call.1} parent=1 // pred_region
      %37 = dma.done [#allocation4], 128
    $region17: #{tpu_custom_call.1} parent=1 // pred_fallthru
      _
    %38 = vsyncpa [#allocation3], 1
    %39 = vsyncpa [#allocation4], 1

</llo_original>
